<compile_context>
chip_gen: v7x
topology: tpu7x:2x2x1
jax: 0.10.0
libtpu: 0.0.40
codegen_flags: <defaults>
</compile_context>

<pallas_src>
import jax
import jax.numpy as jnp
from jax.experimental import pallas as pl
from jax.experimental.pallas import tpu as pltpu


def _round_up(x, m):
    return (x + m - 1) // m * m


def _patch_embed_kernel(x_ref, w_ref, b_ref, o_ref):
    """One (batch sample, token tile, embed_dim tile) per grid step.

    x_ref : VMEM (1, TT, K)   im2col token slab (K = 9*Cin)
    w_ref : VMEM (K, TN)      repacked conv weight slab for this embed tile
    b_ref : VMEM (1, TN)      bias slice for this embed tile
    o_ref : VMEM (1, TT, TN)  output tile, already in (tokens, channels)
    """
    acc = jnp.dot(x_ref[0], w_ref[...], preferred_element_type=jnp.float32)
    acc = acc + b_ref[...].astype(jnp.float32)
    o_ref[0] = acc.astype(o_ref.dtype)


def patch_embed(x, weight, bias, *, tile_t=None, tile_n=None):
    """Pallas implementation of PatchEmbed.forward.

    x      : (B, Cin, H, W)    NCHW input (same as the PyTorch module)
    weight : (Cout, Cin, 3, 3) OIHW conv weight
    bias   : (Cout,)
    returns: (B, H*W, Cout)
    """
    B, Cin, H, W = x.shape
    Cout = weight.shape[0]
    T = H * W
    K = 9 * Cin

    # ---- layout plumbing in the wrapper (done once, pure XLA ops) ---------
    # NCHW -> NHWC, zero-pad spatially by 1 (conv padding=1), then im2col:
    # x_cols[b, h*W+w, (ky*3+kx)*Cin + c] = x_pad[b, h+ky, w+kx, c]
    x_nhwc = jnp.transpose(x, (0, 2, 3, 1))
    x_pad = jnp.pad(x_nhwc, ((0, 0), (1, 1), (1, 1), (0, 0)))
    cols = []
    for ky in range(3):
        for kx in range(3):
            cols.append(x_pad[:, ky:ky + H, kx:kx + W, :])
    x_cols = jnp.concatenate(cols, axis=-1).reshape(B, T, K)

    # (Cout, Cin, 3, 3) -> (3, 3, Cin, Cout) -> (9*Cin, Cout): single matmul slab,
    # tap/channel ordering matches the im2col concat above.
    w_mat = jnp.transpose(weight, (2, 3, 1, 0)).reshape(K, Cout)

    # ---- tiling ------------------------------------------------------------
    # Pad embed_dim to a multiple of 128 so output stores are dense/unmasked.
    Cout_pad = _round_up(Cout, 128)
    if Cout_pad != Cout:
        w_mat = jnp.pad(w_mat, ((0, 0), (0, Cout_pad - Cout)))
        bias = jnp.pad(bias, (0, Cout_pad - Cout))
    b_row = bias.reshape(1, Cout_pad)

    # embed_dim tile: prefer multiples of 256 (maps cleanly onto v6e/v7x
    # 256x256 MXUs), cap at 512 to keep blocks small.
    if tile_n is None:
        for cand in (512, 256, 128):
            if Cout_pad % cand == 0:
                tile_n = cand
                break
    assert Cout_pad % tile_n == 0 and tile_n % 128 == 0

    # token tile: <=512 tokens (output block <= 1 MiB f32 at tile_n=512),
    # multiple of 8 for the sublane constraint; pad the token axis to match.
    if tile_t is None:
        tile_t = min(512, _round_up(T, 8))
    tile_t = _round_up(tile_t, 8)
    T_pad = _round_up(T, tile_t)
    if T_pad != T:
        x_cols = jnp.pad(x_cols, ((0, 0), (0, T_pad - T), (0, 0)))

    grid = (B, T_pad // tile_t, Cout_pad // tile_n)

    out = pl.pallas_call(
        _patch_embed_kernel,
        out_shape=jax.ShapeDtypeStruct((B, T_pad, Cout_pad), x.dtype),
        grid_spec=pltpu.PrefetchScalarGridSpec(
            num_scalar_prefetch=0,
            grid=grid,
            in_specs=[
                # input slab is independent of the (innermost) embed_dim axis
                # -> fetched once per (b, t) and reused across all j tiles.
                pl.BlockSpec((1, tile_t, K), lambda b, t, j: (b, t, 0)),
                pl.BlockSpec((K, tile_n), lambda b, t, j: (0, j)),
                pl.BlockSpec((1, tile_n), lambda b, t, j: (0, j)),
            ],
            out_specs=pl.BlockSpec((1, tile_t, tile_n),
                                   lambda b, t, j: (b, t, j)),
        ),
        compiler_params=pltpu.CompilerParams(
            dimension_semantics=("parallel", "parallel", "parallel")),
    )(x_cols, w_mat, b_row)

    # Strip the token / embed_dim padding.
    return out[:, :T, :Cout]


if __name__ == "__main__":
    key = jax.random.PRNGKey(0)
    kx, kw, kb = jax.random.split(key, 3)

    # Small shapes consistent with the module: batch=2, in_chans=4,
    # spatial=16x16, embed_dim=128 (lane-dense output channel count).
    B, Cin, H, W = 2, 4, 16, 16
    embed_dim = 128

    x = jax.random.normal(kx, (B, Cin, H, W), dtype=jnp.float32)
    weight = jax.random.normal(kw, (embed_dim, Cin, 3, 3), dtype=jnp.float32) * 0.1
    bias = jax.random.normal(kb, (embed_dim,), dtype=jnp.float32) * 0.01

    out = patch_embed(x, weight, bias)
    out = jax.block_until_ready(out)

    # Pure-JAX reference of the PyTorch forward:
    #   proj(x).flatten(2).transpose(1, 2)
    ref = jax.lax.conv_general_dilated(
        x, weight, window_strides=(1, 1), padding=((1, 1), (1, 1)),
        dimension_numbers=("NCHW", "OIHW", "NCHW"),
        precision=jax.lax.Precision.HIGHEST)
    ref = ref + bias.reshape(1, embed_dim, 1, 1)
    ref = ref.reshape(B, embed_dim, H * W).transpose(0, 2, 1)

    assert out.shape == (B, H * W, embed_dim), out.shape
    assert out.dtype == x.dtype, out.dtype
    max_err = jnp.max(jnp.abs(out - ref))
    assert jnp.allclose(out, ref, atol=1e-2, rtol=1e-2), (
        f"mismatch vs reference: max abs err = {max_err}")

    print("KERNEL_OK")
</pallas_src>

<mosaic_0001>
module attributes {stable_mosaic.version = 11 : i64} {
  func.func @_patch_embed_kernel(%arg0: i32, %arg1: i32, %arg2: i32, %arg3: memref<1x256x36xf32, #tpu.memory_space<vmem>>, %arg4: memref<36x128xf32, #tpu.memory_space<vmem>>, %arg5: memref<1x128xf32, #tpu.memory_space<vmem>>, %arg6: memref<1x256x128xf32, #tpu.memory_space<vmem>>) attributes {dimension_semantics = [#tpu.dimension_semantics<parallel>, #tpu.dimension_semantics<parallel>, #tpu.dimension_semantics<parallel>], iteration_bounds = array<i64: 2, 1, 1>, scalar_prefetch = 0 : i64, scratch_operands = 0 : i64, tpu.core_type = #tpu.core_type<tc>, window_params = [{transform_indices = @transform_0, window_bounds = array<i64: 1, 256, 36>}, {transform_indices = @transform_1, window_bounds = array<i64: 36, 128>}, {transform_indices = @transform_2, window_bounds = array<i64: 1, 128>}, {transform_indices = @transform_3, window_bounds = array<i64: 1, 256, 128>}]} {
    %c0 = arith.constant 0 : index
    %c0_0 = arith.constant 0 : index
    %c0_1 = arith.constant 0 : index
    %0 = vector.load %arg3[%c0, %c0_0, %c0_1] : memref<1x256x36xf32, #tpu.memory_space<vmem>>, vector<1x256x36xf32>
    %1 = vector.shape_cast %0 : vector<1x256x36xf32> to vector<256x36xf32>
    %c0_2 = arith.constant 0 : index
    %c0_3 = arith.constant 0 : index
    %2 = vector.load %arg4[%c0_2, %c0_3] : memref<36x128xf32, #tpu.memory_space<vmem>>, vector<36x128xf32>
    %cst = arith.constant dense<0.000000e+00> : vector<256x128xf32>
    %3 = tpu.matmul %1, %2, %cst {dimension_numbers = #tpu.dot_dimension_numbers<[1], [0], [0], [1], [0, 0, 1, 1], [], []>} : vector<256x36xf32>, vector<36x128xf32>, vector<256x128xf32> -> vector<256x128xf32>
    %c0_4 = arith.constant 0 : index
    %c0_5 = arith.constant 0 : index
    %4 = vector.load %arg5[%c0_4, %c0_5] : memref<1x128xf32, #tpu.memory_space<vmem>>, vector<1x128xf32>
    %5 = vector.broadcast %4 : vector<1x128xf32> to vector<256x128xf32>
    %6 = arith.addf %3, %5 : vector<256x128xf32>
    %c0_6 = arith.constant 0 : index
    %c0_7 = arith.constant 0 : index
    %c0_8 = arith.constant 0 : index
    %7 = vector.load %arg6[%c0_6, %c0_7, %c0_8] : memref<1x256x128xf32, #tpu.memory_space<vmem>>, vector<1x256x128xf32>
    %8 = vector.shape_cast %7 : vector<1x256x128xf32> to vector<256x128xf32>
    %9 = vector.shape_cast %6 : vector<256x128xf32> to vector<1x256x128xf32>
    tpu.vector_store %arg6[%c0_6, %c0_7, %c0_8], %9 {strides = array<i32>} : memref<1x256x128xf32, #tpu.memory_space<vmem>>, vector<1x256x128xf32>,
    return
  }
  func.func @transform_0(%arg0: i32, %arg1: i32, %arg2: i32) -> (i32, i32, i32) {
    %c0_i32 = arith.constant 0 : i32
    %c0_i32_0 = arith.constant 0 : i32
    return %arg0, %arg1, %c0_i32 : i32, i32, i32
  }
  func.func @transform_1(%arg0: i32, %arg1: i32, %arg2: i32) -> (i32, i32) {
    %c0_i32 = arith.constant 0 : i32
    %c0_i32_0 = arith.constant 0 : i32
    return %c0_i32, %arg2 : i32, i32
  }
  func.func @transform_2(%arg0: i32, %arg1: i32, %arg2: i32) -> (i32, i32) {
    %c0_i32 = arith.constant 0 : i32
    %c0_i32_0 = arith.constant 0 : i32
    return %c0_i32, %arg2 : i32, i32
  }
  func.func @transform_3(%arg0: i32, %arg1: i32, %arg2: i32) -> (i32, i32, i32) {
    %c0_i32 = arith.constant 0 : i32
    return %arg0, %arg1, %arg2 : i32, i32, i32
  }
}

</mosaic_0001>

<llo_original>
// kernel: tpu_custom_call.1
$region0: #{tpu_custom_call.1}
  #allocation0 [shape = 'u32[]', space=smem, size = 0x4, offset = 0x4, fixed_abs, tag = 'smem constant byte address 0x4 - core index']
  #allocation1 [shape = 'u32[144,128]{1,0:T(1,128)}', space=vmem, size = 0x12000, scoped, tag = 'internal scratch']
  %s0 = inlined_call_operand.vmem [shape: f32[2,256,36], index: 0, kind: input, shape index: {}]
  %s1 = inlined_call_operand.vmem [shape: f32[36,128], index: 1, kind: input, shape index: {}]
  %s2 = inlined_call_operand.vmem [shape: f32[1,128], index: 2, kind: input, shape index: {}]
  %s3 = inlined_call_operand.hbm [shape: f32[2,256,128], index: 3, kind: output, shape index: {}]
  %s4 = sld [smem:[#allocation0]]
  $region45: #{tpu_custom_call.1} parent=0
    _
  %s6 = ssub.s32 1, %s4
  %s7 = scalar_select 0, %s6, %s4
  $region1: #{tpu_custom_call.1} parent=0
    #allocation2 [shape = 'u8[262144]{0}', space=vmem, size = 0x40000, scoped, tag = 'output window, operand 0']
    #allocation3 [shape = 's32[2]{0}', space=sflag, size = 0x8, scoped, tag = 'scoped memory for tpu_custom_call.1']
    %8 = vsyncpa [#allocation3], 0
    %s9 = scalar_lea.sflag [#allocation3], 1
    %10 = vsyncpa %s9, 0
    loop: start=0, step=1, limit=4
    $region2: #{tpu_custom_call.1} parent=1 // loop_pre_header
      _
    $region3: #{tpu_custom_call.1} parent=1 // loop_header
      %s12 = sphi 0, %s16
      %p13 = scmp.ge.s32.totalorder %s12, 4
      %s19 = sphi 0, %s38
      %s20 = sphi 0, %s34
      %s21 = sphi 0, %s30
      %s22 = sphi 0, %s19
      %s23 = sphi 0, %s20
      %s24 = sphi 0, %s21
      %s25 = sphi 0, %s22
      %s26 = sphi 0, %s23
      %s27 = sphi 0, %s24
      %s43 = sphi 0, %s45
      %s46 = sphi 0, %s43
      %s47 = sphi 0, %s46
      %s63 = sphi 0, %s47
      %s69 = sphi 0, %s71
      %s72 = sphi 0, %s69
      %s73 = sphi 0, %s72
      %s89 = sphi 0, %s73
      %s95 = sphi 0, %s97
      %s98 = sphi 0, %s95
      %s99 = sphi 0, %s98
      %s115 = sphi 0, %s99
      %s125 = sphi 0, %s127
      %s128 = sphi 0, %s125
      %s129 = sphi 0, %s128
      %s145 = sphi 0, %s129
    $region4: #{tpu_custom_call.1} parent=1 // loop_header_branch
      %15 = sbr.rel (%p13) target = $region8
    $region5: #{tpu_custom_call.1} parent=1 // loop_body
      %s17 = ssub.s32 %s12, 1
      %s18 = ssub.s32 %s12, 2
      %s28 = sadd.s32 1, %s21
      %p29 = scmp.ge.s32.totalorder %s28, 1
      %s30 = scalar_select %p29, 0, %s28
      %s31 = sadd.s32 1, %s20
      %s32 = scalar_select %p29, %s31, %s20
      %p33 = scmp.ge.s32.totalorder %s32, 1
      %s34 = scalar_select %p33, 0, %s32
      %s35 = sadd.s32 1, %s19
      %s36 = scalar_select %p33, %s35, %s19
      %p37 = scmp.ge.s32.totalorder %s36, 2
      %s38 = scalar_select %p37, 0, %s36
      %s39 = ssub.s32 %s19, %s38
      %s40 = ssub.s32 %s20, %s34
      %s41 = sor.u32 %s39, %s40
      %p42 = scmp.eq.s32.totalorder %s41, 0
      %s44 = sadd.s32 %s43, 1
      %s45 = scalar_select %p42, %s43, %s44
      %p48 = pneg %p42
      %p49 = scmp.eq.s32.totalorder %s12, 1
      %p50 = por %p48, %p49
      %p51 = scmp.ne.s32.totalorder %s43, %s46
      %p52 = scmp.eq.s32.totalorder %s12, 0
      %p53 = por %p51, %p52
      %p54 = scmp.ne.s32.totalorder %s43, %s46
      %p55 = scmp.eq.s32.totalorder %s17, 1
      %p56 = por %p54, %p55
      %p57 = scmp.ne.s32.totalorder %s46, %s47
      %p58 = scmp.eq.s32.totalorder %s17, 0
      %p59 = por %p57, %p58
      %p60 = scmp.ne.s32.totalorder %s46, %s47
      %p61 = scmp.eq.s32.totalorder %s18, 1
      %p62 = por %p60, %p61
      %p64 = scmp.ne.s32.totalorder %s47, %s63
      %p65 = scmp.eq.s32.totalorder %s18, 0
      %p66 = por %p64, %p65
      %s67 = ssub.s32 %s21, %s30
      %p68 = scmp.eq.s32.totalorder %s67, 0
      %s70 = sadd.s32 %s69, 1
      %s71 = scalar_select %p68, %s69, %s70
      %p74 = pneg %p68
      %p75 = scmp.eq.s32.totalorder %s12, 1
      %p76 = por %p74, %p75
      %p77 = scmp.ne.s32.totalorder %s69, %s72
      %p78 = scmp.eq.s32.totalorder %s12, 0
      %p79 = por %p77, %p78
      %p80 = scmp.ne.s32.totalorder %s69, %s72
      %p81 = scmp.eq.s32.totalorder %s17, 1
      %p82 = por %p80, %p81
      %p83 = scmp.ne.s32.totalorder %s72, %s73
      %p84 = scmp.eq.s32.totalorder %s17, 0
      %p85 = por %p83, %p84
      %p86 = scmp.ne.s32.totalorder %s72, %s73
      %p87 = scmp.eq.s32.totalorder %s18, 1
      %p88 = por %p86, %p87
      %p90 = scmp.ne.s32.totalorder %s73, %s89
      %p91 = scmp.eq.s32.totalorder %s18, 0
      %p92 = por %p90, %p91
      %s93 = ssub.s32 %s21, %s30
      %p94 = scmp.eq.s32.totalorder %s93, 0
      %s96 = sadd.s32 %s95, 1
      %s97 = scalar_select %p94, %s95, %s96
      %p100 = pneg %p94
      %p101 = scmp.eq.s32.totalorder %s12, 1
      %p102 = por %p100, %p101
      %p103 = scmp.ne.s32.totalorder %s95, %s98
      %p104 = scmp.eq.s32.totalorder %s12, 0
      %p105 = por %p103, %p104
      %p106 = scmp.ne.s32.totalorder %s95, %s98
      %p107 = scmp.eq.s32.totalorder %s17, 1
      %p108 = por %p106, %p107
      %p109 = scmp.ne.s32.totalorder %s98, %s99
      %p110 = scmp.eq.s32.totalorder %s17, 0
      %p111 = por %p109, %p110
      %p112 = scmp.ne.s32.totalorder %s98, %s99
      %p113 = scmp.eq.s32.totalorder %s18, 1
      %p114 = por %p112, %p113
      %p116 = scmp.ne.s32.totalorder %s99, %s115
      %p117 = scmp.eq.s32.totalorder %s18, 0
      %p118 = por %p116, %p117
      %s119 = ssub.s32 %s19, %s38
      %s120 = ssub.s32 %s20, %s34
      %s121 = sor.u32 %s119, %s120
      %s122 = ssub.s32 %s21, %s30
      %s123 = sor.u32 %s121, %s122
      %p124 = scmp.eq.s32.totalorder %s123, 0
      %s126 = sadd.s32 %s125, 1
      %s127 = scalar_select %p124, %s125, %s126
      %p130 = pneg %p124
      %p131 = scmp.eq.s32.totalorder %s12, 1
      %p132 = por %p130, %p131
      %p133 = scmp.ne.s32.totalorder %s125, %s128
      %p134 = scmp.eq.s32.totalorder %s12, 0
      %p135 = por %p133, %p134
      %p136 = scmp.ne.s32.totalorder %s125, %s128
      %p137 = scmp.eq.s32.totalorder %s17, 1
      %p138 = por %p136, %p137
      %p139 = scmp.ne.s32.totalorder %s128, %s129
      %p140 = scmp.eq.s32.totalorder %s17, 0
      %p141 = por %p139, %p140
      %p142 = scmp.ne.s32.totalorder %s128, %s129
      %p143 = scmp.eq.s32.totalorder %s18, 1
      %p144 = por %p142, %p143
      %p146 = scmp.ne.s32.totalorder %s129, %s145
      %p147 = scmp.eq.s32.totalorder %s18, 0
      %p148 = por %p146, %p147
      %p149 = scmp.le.s32.totalorder 1, %s12
      %p150 = scmp.lt.s32.totalorder %s12, 3
      %p151 = pnand %p149, %p150
      %p152 = pneg %p151
      // Predicated region
      $region9: #{tpu_custom_call.1} parent=5 // pred_check
        _
      $region10: #{tpu_custom_call.1} parent=5 // pred_check_branch
        %154 = sbr.rel (%p151) target = $region12
      $region11: #{tpu_custom_call.1} parent=5 // pred_region
        %s155 = ssub.s32 %s12, 1
        // Predicated region
        $region13: #{tpu_custom_call.1} parent=11 // pred_check
          %p156 = pneg %p85
        $region14: #{tpu_custom_call.1} parent=11 // pred_check_branch
          %158 = sbr.rel (%p156) target = $region16
        $region15: #{tpu_custom_call.1} parent=11 // pred_region
          %p159 = scmp.lt.s32.totalorder %s24, 0
          %s160 = scalar_select %p159, %s24, 0
          %s161 = smul.addr %s160, 8
          %s162 = scalar_lea.vmem %s1, %s161
        $region16: #{tpu_custom_call.1} parent=11 // pred_fallthru
          _
        // Predicated region
        $region17: #{tpu_custom_call.1} parent=11 // pred_check
          %p163 = pneg %p111
        $region18: #{tpu_custom_call.1} parent=11 // pred_check_branch
          %165 = sbr.rel (%p163) target = $region20
        $region19: #{tpu_custom_call.1} parent=11 // pred_region
          %p166 = scmp.lt.s32.totalorder %s24, 0
          %s167 = scalar_select %p166, %s24, 0
          %s168 = scalar_lea.vmem %s2, %s167
        $region20: #{tpu_custom_call.1} parent=11 // pred_fallthru
          _
      $region12: #{tpu_custom_call.1} parent=5 // pred_fallthru
        _
      %p169 = scmp.lt.s32.totalorder %s12, 2
      // Predicated region
      $region21: #{tpu_custom_call.1} parent=5 // pred_check
        %p170 = pneg %p169
      $region22: #{tpu_custom_call.1} parent=5 // pred_check_branch
        %172 = sbr.rel (%p170) target = $region24
      $region23: #{tpu_custom_call.1} parent=5 // pred_region
        // Predicated region
        $region25: #{tpu_custom_call.1} parent=23 // pred_check
          %p173 = pneg %p53
        $region26: #{tpu_custom_call.1} parent=23 // pred_check_branch
          %175 = sbr.rel (%p173) target = $region28
        $region27: #{tpu_custom_call.1} parent=23 // pred_region
          %s176 = smul.u32 32, %s20
          %p177 = scmp.lt.s32.totalorder %s19, 1
          %s178 = scalar_select %p177, %s19, 1
          %p179 = scmp.lt.s32.totalorder %s176, 31
          %s180 = scalar_select %p179, %s176, 31
          %s181 = smul.addr %s178, 32
          %s182 = sadd.s32 %s180, %s181
          %s183 = smul.addr %s182, 8
          %s184 = scalar_lea.vmem %s0, %s183
          %s185 = smul.u32 32, %s20
        $region28: #{tpu_custom_call.1} parent=23 // pred_fallthru
          _
      $region24: #{tpu_custom_call.1} parent=5 // pred_fallthru
        _
      %p186 = scmp.le.s32.totalorder 1, %s12
      %p187 = scmp.lt.s32.totalorder %s12, 3
      %p188 = pnand %p186, %p187
      %p189 = pneg %p188
      // Predicated region
      $region29: #{tpu_custom_call.1} parent=5 // pred_check
        _
      $region30: #{tpu_custom_call.1} parent=5 // pred_check_branch
        %191 = sbr.rel (%p188) target = $region32
      $region31: #{tpu_custom_call.1} parent=5 // pred_region
        %s192 = ssub.s32 %s12, 1
        %s193 = smul.u32 32, %s23
        %p194 = scmp.lt.s32.totalorder %s22, 1
        %s195 = scalar_select %p194, %s22, 1
        %p196 = scmp.lt.s32.totalorder %s193, 31
        %s197 = scalar_select %p196, %s193, 31
        %s198 = smul.addr %s195, 32
        %s199 = sadd.s32 %s197, %s198
        %s200 = smul.addr %s199, 8
        %s201 = scalar_lea.vmem %s0, %s200
        %p202 = pneg %p59
        %p203 = pneg %p56
        %p204 = scmp.lt.s32.totalorder %s24, 0
        %s205 = scalar_select %p204, %s24, 0
        %s206 = smul.addr %s205, 8
        %s207 = scalar_lea.vmem %s1, %s206
        %p208 = pneg %p85
        %p209 = pneg %p82
        %p210 = scmp.lt.s32.totalorder %s24, 0
        %s211 = scalar_select %p210, %s24, 0
        %s212 = scalar_lea.vmem %s2, %s211
        %p213 = pneg %p111
        %p214 = pneg %p108
        %p215 = pneg %p141
        %p216 = pneg %p138
        %s217 = sand.u32 %s128, 1
        %s218 = scalar_lea.sflag [#allocation3], %s217
        %s219 = sand.u32 %s128, 1
        %s220 = smul.addr %s219, 256
        %s221 = scalar_lea.vmem [#allocation2], %s220
        %s222 = smul.u32 32, %s23
        %p223 = scmp.lt.s32.totalorder %s22, 1
        %s224 = scalar_select %p223, %s22, 1
        %p225 = scmp.lt.s32.totalorder %s222, 31
        %s226 = scalar_select %p225, %s222, 31
        %s227 = smul.addr %s224, 32
        %s228 = sadd.s32 %s226, %s227
        %s229 = smul.addr %s228, 8
        %s230 = scalar_lea.vmem %s0, %s229
        %s231 = smul.u32 32, %s23
        %p232 = scmp.lt.s32.totalorder %s24, 0
        %s233 = scalar_select %p232, %s24, 0
        %s234 = smul.addr %s233, 8
        %s235 = scalar_lea.vmem %s1, %s234
        %p236 = scmp.lt.s32.totalorder %s24, 0
        %s237 = scalar_select %p236, %s24, 0
        %s238 = scalar_lea.vmem %s2, %s237
        %s239 = smul.u32 32, %s23
        %v240 = vld [vmem:[%s230] sm:$0xff]
        %v241 = vld [vmem:[%s230 + $0x8] sm:$0xff]
        %v242 = vld [vmem:[%s230 + $0x10] sm:$0xff]
        %v243 = vld [vmem:[%s230 + $0x18] sm:$0xff]
        %v244 = vld [vmem:[%s230 + $0x20] sm:$0xff]
        %v245 = vld [vmem:[%s230 + $0x28] sm:$0xff]
        %v246 = vld [vmem:[%s230 + $0x30] sm:$0xff]
        %v247 = vld [vmem:[%s230 + $0x38] sm:$0xff]
        %v248 = vld [vmem:[%s230 + $0x40] sm:$0xff]
        %v249 = vld [vmem:[%s230 + $0x48] sm:$0xff]
        %v250 = vld [vmem:[%s230 + $0x50] sm:$0xff]
        %v251 = vld [vmem:[%s230 + $0x58] sm:$0xff]
        %v252 = vld [vmem:[%s230 + $0x60] sm:$0xff]
        %v253 = vld [vmem:[%s230 + $0x68] sm:$0xff]
        %v254 = vld [vmem:[%s230 + $0x70] sm:$0xff]
        %v255 = vld [vmem:[%s230 + $0x78] sm:$0xff]
        %v256 = vld [vmem:[%s230 + $0x80] sm:$0xff]
        %v257 = vld [vmem:[%s230 + $0x88] sm:$0xff]
        %v258 = vld [vmem:[%s230 + $0x90] sm:$0xff]
        %v259 = vld [vmem:[%s230 + $0x98] sm:$0xff]
        %v260 = vld [vmem:[%s230 + $0xa0] sm:$0xff]
        %v261 = vld [vmem:[%s230 + $0xa8] sm:$0xff]
        %v262 = vld [vmem:[%s230 + $0xb0] sm:$0xff]
        %v263 = vld [vmem:[%s230 + $0xb8] sm:$0xff]
        %v264 = vld [vmem:[%s230 + $0xc0] sm:$0xff]
        %v265 = vld [vmem:[%s230 + $0xc8] sm:$0xff]
        %v266 = vld [vmem:[%s230 + $0xd0] sm:$0xff]
        %v267 = vld [vmem:[%s230 + $0xd8] sm:$0xff]
        %v268 = vld [vmem:[%s230 + $0xe0] sm:$0xff]
        %v269 = vld [vmem:[%s230 + $0xe8] sm:$0xff]
        %v270 = vld [vmem:[%s230 + $0xf0] sm:$0xff]
        %v271 = vld [vmem:[%s230 + $0xf8] sm:$0xff]
        %v272 = vld [vmem:[%s235] sm:$0xff]
        %v273 = vld [vmem:[%s235 + $0x8] sm:$0xff]
        %v274 = vld [vmem:[%s235 + $0x10] sm:$0xff]
        %v275 = vld [vmem:[%s235 + $0x18] sm:$0xff]
        %v276 = vld [vmem:[%s235 + $0x20] sm:$0xf]
        %v277 = vld [vmem:[%s238] sm:$0x1]
        %v279 = vlaneseq
        %v280 = vshrl.u32 %v279, 7
        %v281 = vsub.s32 0, %v280
        %v282 = vrot.slane %v277, %v281
        %vm284 = vcmask 293888
        %v286 = vsel %vm284, %v240, 0
        %v289 = vsel %vm284, %v241, 0
        %v292 = vsel %vm284, %v242, 0
        %v295 = vsel %vm284, %v243, 0
        %v298 = vsel %vm284, %v244, 0
        %v301 = vsel %vm284, %v245, 0
        %v304 = vsel %vm284, %v246, 0
        %v307 = vsel %vm284, %v247, 0
        %v310 = vsel %vm284, %v248, 0
        %v313 = vsel %vm284, %v249, 0
        %v316 = vsel %vm284, %v250, 0
        %v319 = vsel %vm284, %v251, 0
        %v322 = vsel %vm284, %v252, 0
        %v325 = vsel %vm284, %v253, 0
        %v328 = vsel %vm284, %v254, 0
        %v331 = vsel %vm284, %v255, 0
        %v334 = vsel %vm284, %v256, 0
        %v337 = vsel %vm284, %v257, 0
        %v340 = vsel %vm284, %v258, 0
        %v343 = vsel %vm284, %v259, 0
        %v346 = vsel %vm284, %v260, 0
        %v349 = vsel %vm284, %v261, 0
        %v352 = vsel %vm284, %v262, 0
        %v355 = vsel %vm284, %v263, 0
        %v358 = vsel %vm284, %v264, 0
        %v361 = vsel %vm284, %v265, 0
        %v364 = vsel %vm284, %v266, 0
        %v367 = vsel %vm284, %v267, 0
        %v370 = vsel %vm284, %v268, 0
        %v373 = vsel %vm284, %v269, 0
        %v376 = vsel %vm284, %v270, 0
        %v379 = vsel %vm284, %v271, 0
        %vm381 = vcmask 1043456
        %v383 = vsel %vm381, %v276, 0
        %385 = vmatprep.subr.mxu0 0.0
        %386 = vmatpush1.msra.mxu0 %v272
        %387 = vmatprep.subr.mxu0 0.0
        %388 = vmatpush1.msra.mxu0 %v273
        %389 = vmatprep.subr.mxu0 0.0
        %390 = vmatpush1.msra.mxu0 %v274
        %391 = vmatprep.subr.mxu0 0.0
        %392 = vmatpush1.msra.mxu0 %v275
        %393 = vmatprep.subr.mxu0 0.0
        %394 = vmatpush1.msra.mxu0 %v383
        %395 = vmatprep.subr.mxu0 0.0
        %396 = vmatpush1.msra.mxu0 0.0
        %397 = vmatprep.subr.mxu0 0.0
        %398 = vmatpush1.msra.mxu0 0.0
        %399 = vmatprep.subr.mxu0 0.0
        %400 = vmatpush1.msra.mxu0 0.0
        %401 = vmatprep.subr.mxu0 0.0
        %402 = vmatpush1.msra.mxu0 0.0
        %403 = vmatprep.subr.mxu0 0.0
        %404 = vmatpush1.msra.mxu0 0.0
        %405 = vmatprep.subr.mxu0 0.0
        %406 = vmatpush1.msra.mxu0 0.0
        %407 = vmatprep.subr.mxu0 0.0
        %408 = vmatpush1.msra.mxu0 0.0
        %409 = vmatprep.subr.mxu0 0.0
        %410 = vmatpush1.msra.mxu0 0.0
        %411 = vmatprep.subr.mxu0 0.0
        %412 = vmatpush1.msra.mxu0 0.0
        %413 = vmatprep.subr.mxu0 0.0
        %414 = vmatpush1.msra.mxu0 0.0
        %415 = vmatprep.subr.mxu0 0.0
        %416 = vmatpush1.msra.mxu0 0.0
        %417 = vmatprep.subr.mxu0 0.0
        %418 = vmatpush1.msra.mxu0 0.0
        %419 = vmatprep.subr.mxu0 0.0
        %420 = vmatpush1.msra.mxu0 0.0
        %421 = vmatprep.subr.mxu0 0.0
        %422 = vmatpush1.msra.mxu0 0.0
        %423 = vmatprep.subr.mxu0 0.0
        %424 = vmatpush1.msra.mxu0 0.0
        %425 = vmatprep.subr.mxu0 0.0
        %426 = vmatpush1.msra.mxu0 0.0
        %427 = vmatprep.subr.mxu0 0.0
        %428 = vmatpush1.msra.mxu0 0.0
        %429 = vmatprep.subr.mxu0 0.0
        %430 = vmatpush1.msra.mxu0 0.0
        %431 = vmatprep.subr.mxu0 0.0
        %432 = vmatpush1.msra.mxu0 0.0
        %433 = vmatprep.subr.mxu0 0.0
        %434 = vmatpush1.msra.mxu0 0.0
        %435 = vmatprep.subr.mxu0 0.0
        %436 = vmatpush1.msra.mxu0 0.0
        %437 = vmatprep.subr.mxu0 0.0
        %438 = vmatpush1.msra.mxu0 0.0
        %439 = vmatprep.subr.mxu0 0.0
        %440 = vmatpush1.msra.mxu0 0.0
        %441 = vmatprep.subr.mxu0 0.0
        %442 = vmatpush1.msra.mxu0 0.0
        %443 = vmatprep.subr.mxu0 0.0
        %444 = vmatpush1.msra.mxu0 0.0
        %445 = vmatprep.subr.mxu0 0.0
        %446 = vmatpush1.msra.mxu0 0.0
        %447 = vmatprep.subr.mxu0 0.0
        %448 = vmatpush1.msra.mxu0 0.0
        %449 = vmatprep.mubr.f32.mxu0 0.0
        %450 = vmatmul.mubr.f32.gmra.mrb[0].mxu0 %v286
        %v451 = vpop.f32.mrb[0].mxu0
        %v452 = vadd.f32 %v282, %v451
        %v453 = vpop.f32.mrb[0].mxu0
        %454 = vmatprep.mubr.f32.mxu0 0.0
        %455 = vmatmul.mubr.f32.gmra.mrb[0].mxu0 %v289
        %v456 = vpop.f32.mrb[0].mxu0
        %v457 = vadd.f32 %v282, %v456
        %v458 = vpop.f32.mrb[0].mxu0
        %459 = vmatprep.mubr.f32.mxu0 0.0
        %460 = vmatmul.mubr.f32.gmra.mrb[0].mxu0 %v292
        %v461 = vpop.f32.mrb[0].mxu0
        %v462 = vadd.f32 %v282, %v461
        %v463 = vpop.f32.mrb[0].mxu0
        %464 = vmatprep.mubr.f32.mxu0 0.0
        %465 = vmatmul.mubr.f32.gmra.mrb[0].mxu0 %v295
        %v466 = vpop.f32.mrb[0].mxu0
        %v467 = vadd.f32 %v282, %v466
        %v468 = vpop.f32.mrb[0].mxu0
        %469 = vmatprep.mubr.f32.mxu0 0.0
        %470 = vmatmul.mubr.f32.gmra.mrb[0].mxu0 %v298
        %v471 = vpop.f32.mrb[0].mxu0
        %v472 = vadd.f32 %v282, %v471
        %v473 = vpop.f32.mrb[0].mxu0
        %474 = vmatprep.mubr.f32.mxu0 0.0
        %475 = vmatmul.mubr.f32.gmra.mrb[0].mxu0 %v301
        %v476 = vpop.f32.mrb[0].mxu0
        %v477 = vadd.f32 %v282, %v476
        %v478 = vpop.f32.mrb[0].mxu0
        %479 = vmatprep.mubr.f32.mxu0 0.0
        %480 = vmatmul.mubr.f32.gmra.mrb[0].mxu0 %v304
        %v481 = vpop.f32.mrb[0].mxu0
        %v482 = vadd.f32 %v282, %v481
        %v483 = vpop.f32.mrb[0].mxu0
        %484 = vmatprep.mubr.f32.mxu0 0.0
        %485 = vmatmul.mubr.f32.gmra.mrb[0].mxu0 %v307
        %v486 = vpop.f32.mrb[0].mxu0
        %v487 = vadd.f32 %v282, %v486
        %v488 = vpop.f32.mrb[0].mxu0
        %489 = vmatprep.mubr.f32.mxu0 0.0
        %490 = vmatmul.mubr.f32.gmra.mrb[0].mxu0 %v310
        %v491 = vpop.f32.mrb[0].mxu0
        %v492 = vadd.f32 %v282, %v491
        %v493 = vpop.f32.mrb[0].mxu0
        %494 = vmatprep.mubr.f32.mxu0 0.0
        %495 = vmatmul.mubr.f32.gmra.mrb[0].mxu0 %v313
        %v496 = vpop.f32.mrb[0].mxu0
        %v497 = vadd.f32 %v282, %v496
        %v498 = vpop.f32.mrb[0].mxu0
        %499 = vmatprep.mubr.f32.mxu0 0.0
        %500 = vmatmul.mubr.f32.gmra.mrb[0].mxu0 %v316
        %v501 = vpop.f32.mrb[0].mxu0
        %v502 = vadd.f32 %v282, %v501
        %v503 = vpop.f32.mrb[0].mxu0
        %504 = vmatprep.mubr.f32.mxu0 0.0
        %505 = vmatmul.mubr.f32.gmra.mrb[0].mxu0 %v319
        %v506 = vpop.f32.mrb[0].mxu0
        %v507 = vadd.f32 %v282, %v506
        %v508 = vpop.f32.mrb[0].mxu0
        %509 = vmatprep.mubr.f32.mxu0 0.0
        %510 = vmatmul.mubr.f32.gmra.mrb[0].mxu0 %v322
        %v511 = vpop.f32.mrb[0].mxu0
        %v512 = vadd.f32 %v282, %v511
        %v513 = vpop.f32.mrb[0].mxu0
        %514 = vmatprep.mubr.f32.mxu0 0.0
        %515 = vmatmul.mubr.f32.gmra.mrb[0].mxu0 %v325
        %v516 = vpop.f32.mrb[0].mxu0
        %v517 = vadd.f32 %v282, %v516
        %v518 = vpop.f32.mrb[0].mxu0
        %519 = vmatprep.mubr.f32.mxu0 0.0
        %520 = vmatmul.mubr.f32.gmra.mrb[0].mxu0 %v328
        %v521 = vpop.f32.mrb[0].mxu0
        %v522 = vadd.f32 %v282, %v521
        %v523 = vpop.f32.mrb[0].mxu0
        %524 = vmatprep.mubr.f32.mxu0 0.0
        %525 = vmatmul.mubr.f32.gmra.mrb[0].mxu0 %v331
        %v526 = vpop.f32.mrb[0].mxu0
        %v527 = vadd.f32 %v282, %v526
        %v528 = vpop.f32.mrb[0].mxu0
        %529 = vmatprep.mubr.f32.mxu0 0.0
        %530 = vmatmul.mubr.f32.gmra.mrb[0].mxu0 %v334
        %v531 = vpop.f32.mrb[0].mxu0
        %v532 = vadd.f32 %v282, %v531
        %v533 = vpop.f32.mrb[0].mxu0
        %534 = vmatprep.mubr.f32.mxu0 0.0
        %535 = vmatmul.mubr.f32.gmra.mrb[0].mxu0 %v337
        %v536 = vpop.f32.mrb[0].mxu0
        %v537 = vadd.f32 %v282, %v536
        %v538 = vpop.f32.mrb[0].mxu0
        %539 = vmatprep.mubr.f32.mxu0 0.0
        %540 = vmatmul.mubr.f32.gmra.mrb[0].mxu0 %v340
        %v541 = vpop.f32.mrb[0].mxu0
        %v542 = vadd.f32 %v282, %v541
        %v543 = vpop.f32.mrb[0].mxu0
        %544 = vmatprep.mubr.f32.mxu0 0.0
        %545 = vmatmul.mubr.f32.gmra.mrb[0].mxu0 %v343
        %v546 = vpop.f32.mrb[0].mxu0
        %v547 = vadd.f32 %v282, %v546
        %v548 = vpop.f32.mrb[0].mxu0
        %549 = vmatprep.mubr.f32.mxu0 0.0
        %550 = vmatmul.mubr.f32.gmra.mrb[0].mxu0 %v346
        %v551 = vpop.f32.mrb[0].mxu0
        %v552 = vadd.f32 %v282, %v551
        %v553 = vpop.f32.mrb[0].mxu0
        %554 = vmatprep.mubr.f32.mxu0 0.0
        %555 = vmatmul.mubr.f32.gmra.mrb[0].mxu0 %v349
        %v556 = vpop.f32.mrb[0].mxu0
        %v557 = vadd.f32 %v282, %v556
        %v558 = vpop.f32.mrb[0].mxu0
        %559 = vmatprep.mubr.f32.mxu0 0.0
        %560 = vmatmul.mubr.f32.gmra.mrb[0].mxu0 %v352
        %v561 = vpop.f32.mrb[0].mxu0
        %v562 = vadd.f32 %v282, %v561
        %v563 = vpop.f32.mrb[0].mxu0
        %564 = vmatprep.mubr.f32.mxu0 0.0
        %565 = vmatmul.mubr.f32.gmra.mrb[0].mxu0 %v355
        %v566 = vpop.f32.mrb[0].mxu0
        %v567 = vadd.f32 %v282, %v566
        %v568 = vpop.f32.mrb[0].mxu0
        %569 = vmatprep.mubr.f32.mxu0 0.0
        %570 = vmatmul.mubr.f32.gmra.mrb[0].mxu0 %v358
        %v571 = vpop.f32.mrb[0].mxu0
        %v572 = vadd.f32 %v282, %v571
        %v573 = vpop.f32.mrb[0].mxu0
        %574 = vmatprep.mubr.f32.mxu0 0.0
        %575 = vmatmul.mubr.f32.gmra.mrb[0].mxu0 %v361
        %v576 = vpop.f32.mrb[0].mxu0
        %v577 = vadd.f32 %v282, %v576
        %v578 = vpop.f32.mrb[0].mxu0
        %579 = vmatprep.mubr.f32.mxu0 0.0
        %580 = vmatmul.mubr.f32.gmra.mrb[0].mxu0 %v364
        %v581 = vpop.f32.mrb[0].mxu0
        %v582 = vadd.f32 %v282, %v581
        %v583 = vpop.f32.mrb[0].mxu0
        %584 = vmatprep.mubr.f32.mxu0 0.0
        %585 = vmatmul.mubr.f32.gmra.mrb[0].mxu0 %v367
        %v586 = vpop.f32.mrb[0].mxu0
        %v587 = vadd.f32 %v282, %v586
        %v588 = vpop.f32.mrb[0].mxu0
        %589 = vmatprep.mubr.f32.mxu0 0.0
        %590 = vmatmul.mubr.f32.gmra.mrb[0].mxu0 %v370
        %v591 = vpop.f32.mrb[0].mxu0
        %v592 = vadd.f32 %v282, %v591
        %v593 = vpop.f32.mrb[0].mxu0
        %594 = vmatprep.mubr.f32.mxu0 0.0
        %595 = vmatmul.mubr.f32.gmra.mrb[0].mxu0 %v373
        %v596 = vpop.f32.mrb[0].mxu0
        %v597 = vadd.f32 %v282, %v596
        %v598 = vpop.f32.mrb[0].mxu0
        %599 = vmatprep.mubr.f32.mxu0 0.0
        %600 = vmatmul.mubr.f32.gmra.mrb[0].mxu0 %v376
        %v601 = vpop.f32.mrb[0].mxu0
        %v602 = vadd.f32 %v282, %v601
        %v603 = vpop.f32.mrb[0].mxu0
        %604 = vmatprep.mubr.f32.mxu0 0.0
        %605 = vmatmul.mubr.f32.gmra.mrb[0].mxu0 %v379
        %v606 = vpop.f32.mrb[0].mxu0
        %v607 = vadd.f32 %v282, %v606
        %v608 = vpop.f32.mrb[0].mxu0
        %609 = vdwg.mxu0
        %610 = vst [vmem:[%s221] sm:$0xff] %v452
        %611 = vst [vmem:[%s221 + $0x8] sm:$0xff] %v457
        %612 = vst [vmem:[%s221 + $0x10] sm:$0xff] %v462
        %613 = vst [vmem:[%s221 + $0x18] sm:$0xff] %v467
        %614 = vst [vmem:[%s221 + $0x20] sm:$0xff] %v472
        %615 = vst [vmem:[%s221 + $0x28] sm:$0xff] %v477
        %616 = vst [vmem:[%s221 + $0x30] sm:$0xff] %v482
        %617 = vst [vmem:[%s221 + $0x38] sm:$0xff] %v487
        %618 = vst [vmem:[%s221 + $0x40] sm:$0xff] %v492
        %619 = vst [vmem:[%s221 + $0x48] sm:$0xff] %v497
        %620 = vst [vmem:[%s221 + $0x50] sm:$0xff] %v502
        %621 = vst [vmem:[%s221 + $0x58] sm:$0xff] %v507
        %622 = vst [vmem:[%s221 + $0x60] sm:$0xff] %v512
        %623 = vst [vmem:[%s221 + $0x68] sm:$0xff] %v517
        %624 = vst [vmem:[%s221 + $0x70] sm:$0xff] %v522
        %625 = vst [vmem:[%s221 + $0x78] sm:$0xff] %v527
        %626 = vst [vmem:[%s221 + $0x80] sm:$0xff] %v532
        %627 = vst [vmem:[%s221 + $0x88] sm:$0xff] %v537
        %628 = vst [vmem:[%s221 + $0x90] sm:$0xff] %v542
        %629 = vst [vmem:[%s221 + $0x98] sm:$0xff] %v547
        %630 = vst [vmem:[%s221 + $0xa0] sm:$0xff] %v552
        %631 = vst [vmem:[%s221 + $0xa8] sm:$0xff] %v557
        %632 = vst [vmem:[%s221 + $0xb0] sm:$0xff] %v562
        %633 = vst [vmem:[%s221 + $0xb8] sm:$0xff] %v567
        %634 = vst [vmem:[%s221 + $0xc0] sm:$0xff] %v572
        %635 = vst [vmem:[%s221 + $0xc8] sm:$0xff] %v577
        %636 = vst [vmem:[%s221 + $0xd0] sm:$0xff] %v582
        %637 = vst [vmem:[%s221 + $0xd8] sm:$0xff] %v587
        %638 = vst [vmem:[%s221 + $0xe0] sm:$0xff] %v592
        %639 = vst [vmem:[%s221 + $0xe8] sm:$0xff] %v597
        %640 = vst [vmem:[%s221 + $0xf0] sm:$0xff] %v602
        %641 = vst [vmem:[%s221 + $0xf8] sm:$0xff] %v607
        %s642 = sand.u32 %s128, 1
        %s643 = scalar_lea.sflag [#allocation3], %s642
        %s644 = sand.u32 %s128, 1
        %s645 = smul.addr %s644, 256
        %s646 = scalar_lea.vmem [#allocation2], %s645
        // Predicated region
        $region33: #{tpu_custom_call.1} parent=31 // pred_check
          %p647 = pneg %p138
        $region34: #{tpu_custom_call.1} parent=31 // pred_check_branch
          %649 = sbr.rel (%p647) target = $region36
        $region35: #{tpu_custom_call.1} parent=31 // pred_region
          %s650 = smul.u32 32, %s23
          %s652 = ssub.s32 4096, 4096
          %653 = vsyncadd %s643, %s652
          %s654 = sadd.s32 %s24, %s650
          %s655 = smul.addr %s22, 32
          %s656 = sadd.s32 %s654, %s655
          %s657 = smul.addr %s656, 128
          %s658 = scalar_lea.hbm %s3, %s657
          %s659 = sshll.u32 %s646, 4
          %s660 = int_to_ptr.vmem [resolvable:$true] %s659
          %665 = dma.vmem_to_hbm [thread:$0]  %s660, 4096, %s658, %s643, 128, 128, 8
        $region36: #{tpu_custom_call.1} parent=31 // pred_fallthru
          _
      $region32: #{tpu_custom_call.1} parent=5 // pred_fallthru
        _
      %p666 = scmp.le.s32.totalorder 2, %s12
      // Predicated region
      $region37: #{tpu_custom_call.1} parent=5 // pred_check
        %p667 = pneg %p666
      $region38: #{tpu_custom_call.1} parent=5 // pred_check_branch
        %669 = sbr.rel (%p667) target = $region40
      $region39: #{tpu_custom_call.1} parent=5 // pred_region
        %s670 = ssub.s32 %s12, 2
        // Predicated region
        $region41: #{tpu_custom_call.1} parent=39 // pred_check
          %p671 = pneg %p144
        $region42: #{tpu_custom_call.1} parent=39 // pred_check_branch
          %673 = sbr.rel (%p671) target = $region44
        $region43: #{tpu_custom_call.1} parent=39 // pred_region
          %s674 = sand.u32 %s129, 1
          %s675 = scalar_lea.sflag [#allocation3], %s674
          %s676 = sand.u32 %s129, 1
          %s677 = smul.addr %s676, 256
          %s678 = scalar_lea.vmem [#allocation2], %s677
          %679 = dma.done %s675, 4096
        $region44: #{tpu_custom_call.1} parent=39 // pred_fallthru
          _
      $region40: #{tpu_custom_call.1} parent=5 // pred_fallthru
        _
    $region6: #{tpu_custom_call.1} parent=1 // loop_footer
      %s16 = sadd.s32 1, %s12
    $region7: #{tpu_custom_call.1} parent=1 // loop_footer_branch
      %11 = sbr.rel target = $region3
    $region8: #{tpu_custom_call.1} parent=1 // loop_exit
      _
    %680 = vsyncpa [#allocation3], 1
    %s681 = scalar_lea.sflag [#allocation3], 1
    %682 = vsyncpa %s681, 1

</llo_original>
